<compile_context>
chip_gen: v7x
topology: tpu7x:2x2x1
jax: 0.10.0
libtpu: 0.0.40
codegen_flags: <defaults>
</compile_context>

<pallas_src>
import jax
import jax.numpy as jnp
from jax.experimental import pallas as pl
from jax.experimental.pallas import tpu as pltpu


def _pick_tile(n, target):
    """Largest multiple of 128 that divides n and is <= target, else n (full dim)."""
    best = None
    t = 128
    while t <= min(n, target):
        if n % t == 0:
            best = t
        t += 128
    return best if best is not None else n


# ---------------------------------------------------------------------------
# Stage 1: key / value 1x1 convs (channel-wise matmuls), computed once per
# spatial position so the attention stage never recomputes them per q tile.
# ---------------------------------------------------------------------------
def _kv_proj_kernel(x_ref, wk_ref, wv_ref, bk_ref, bv_ref, k_ref, v_ref):
    x = x_ref[0]                                                    # (C, tn) f32

    # Keys kept f32 (scores feed a softmax); K is only C/8 channels so the
    # extra MXU cost is negligible.  Store K transposed (N-major) so the
    # attention score matmul is a canonical jnp.dot with no in-loop transpose.
    k = jnp.dot(wk_ref[...], x, preferred_element_type=jnp.float32) + bk_ref[...]
    k_ref[0] = k.T.astype(k_ref.dtype)                              # (tn, C8)

    # Values: bf16 MXU operands, f32 accumulation (attn@V dominates FLOPs).
    v = jnp.dot(wv_ref[...], x.astype(jnp.bfloat16),
                preferred_element_type=jnp.float32) + bv_ref[...]
    v_ref[0] = v.astype(v_ref.dtype)                                # (C, tn) bf16


# ---------------------------------------------------------------------------
# Stage 2: flash-style position attention + query projection + residual.
# ---------------------------------------------------------------------------
def _pam_attn_kernel(x_ref, k_ref, v_ref, wq_ref, bq_ref, gamma_ref, o_ref,
                     q_scr, m_scr, l_scr, acc_scr):
    ki = pl.program_id(2)

    @pl.when(ki == 0)
    def _init():
        # Project the query tile once per (b, q-tile); it stays VMEM-resident
        # across all kv steps (x block index is constant along the kv axis).
        xq = x_ref[0]                                               # (C, tq) f32
        q = jnp.dot(wq_ref[...], xq,
                    preferred_element_type=jnp.float32) + bq_ref[...]
        q_scr[...] = q                                              # (C8, tq)
        m_scr[...] = jnp.full(m_scr.shape, -jnp.inf, dtype=m_scr.dtype)
        l_scr[...] = jnp.zeros(l_scr.shape, dtype=l_scr.dtype)
        acc_scr[...] = jnp.zeros(acc_scr.shape, dtype=acc_scr.dtype)

    k = k_ref[0]                                                    # (tk, C8) f32
    v = v_ref[0]                                                    # (C, tk) bf16

    # scores s[j, i] = <k_j, q_i>  (j = key position, i = query position)
    s = jnp.dot(k, q_scr[...], preferred_element_type=jnp.float32)  # (tk, tq)

    # Online softmax over the key axis (sublanes), per query column.
    m_prev = m_scr[...]                                             # (1, tq)
    m_new = jnp.maximum(m_prev, jnp.max(s, axis=0, keepdims=True))
    alpha = jnp.exp(m_prev - m_new)                                 # (1, tq)
    p = jnp.exp(s - m_new)                                          # (tk, tq) f32
    l_scr[...] = alpha * l_scr[...] + jnp.sum(p, axis=0, keepdims=True)
    acc_scr[...] = alpha * acc_scr[...] + jnp.dot(
        v, p.astype(jnp.bfloat16), preferred_element_type=jnp.float32)  # (C, tq)
    m_scr[...] = m_new

    @pl.when(ki == pl.num_programs(2) - 1)
    def _finalize():
        inv_l = pl.reciprocal(l_scr[...], approx=True)              # EUP slot
        out = gamma_ref[0, 0] * (acc_scr[...] * inv_l) + x_ref[0]   # residual
        o_ref[0] = out.astype(o_ref.dtype)                          # single store


def pam_forward(x_nchw, wq, wk, wv, bq, bk, bv, gamma, *, tq=None, tk=None, tn=None):
    """PAM forward.

    x_nchw: (B, C, H, W) f32.  wq/wk: (C//8, C), wv: (C, C) (PyTorch conv
    weights squeezed).  bq/bk: (C//8,), bv: (C,), gamma: scalar.
    Returns (B, C, H, W).
    """
    B, C, H, W = x_nchw.shape
    N = H * W
    C8 = wq.shape[0]
    f32 = jnp.float32

    # NCHW -> (B, C, N) is a free reshape (no transpose).
    x_bcn = x_nchw.reshape(B, C, N)

    # Tile sizes: modest defaults keep well under the 32 MiB scoped VMEM on
    # v7x (64 MiB physical) while staying >=128 on the lane axis.
    tq = _pick_tile(N, 512) if tq is None else tq
    tk = _pick_tile(N, 256) if tk is None else tk
    tn = _pick_tile(N, 512) if tn is None else tn
    assert N % tq == 0 and N % tk == 0 and N % tn == 0, "tiles must divide H*W"

    bq2 = bq.reshape(C8, 1).astype(f32)
    bk2 = bk.reshape(C8, 1).astype(f32)
    bv2 = bv.reshape(C, 1).astype(f32)
    gamma2 = jnp.asarray(gamma, f32).reshape(1, 1)
    wq_f32 = wq.astype(f32)
    wk_f32 = wk.astype(f32)
    wv_bf16 = wv.astype(jnp.bfloat16)

    # ---- stage 1: K (f32, N-major) and V (bf16) projections ----------------
    k_all, v_all = pl.pallas_call(
        _kv_proj_kernel,
        out_shape=(jax.ShapeDtypeStruct((B, N, C8), f32),
                   jax.ShapeDtypeStruct((B, C, N), jnp.bfloat16)),
        grid_spec=pltpu.PrefetchScalarGridSpec(
            num_scalar_prefetch=0,
            grid=(B, N // tn),
            in_specs=[
                pl.BlockSpec((1, C, tn), lambda b, n: (b, 0, n)),    # x
                pl.BlockSpec((C8, C), lambda b, n: (0, 0)),          # wk (resident)
                pl.BlockSpec((C, C), lambda b, n: (0, 0)),           # wv (resident)
                pl.BlockSpec((C8, 1), lambda b, n: (0, 0)),          # bk
                pl.BlockSpec((C, 1), lambda b, n: (0, 0)),           # bv
            ],
            out_specs=(pl.BlockSpec((1, tn, C8), lambda b, n: (b, n, 0)),
                       pl.BlockSpec((1, C, tn), lambda b, n: (b, 0, n))),
        ),
        compiler_params=pltpu.CompilerParams(
            dimension_semantics=("parallel", "parallel"),
            vmem_limit_bytes=32 * 1024 * 1024),
    )(x_bcn, wk_f32, wv_bf16, bk2, bv2)

    # ---- stage 2: flash-style attention + residual --------------------------
    out_bcn = pl.pallas_call(
        _pam_attn_kernel,
        out_shape=jax.ShapeDtypeStruct((B, C, N), x_nchw.dtype),
        grid_spec=pltpu.PrefetchScalarGridSpec(
            num_scalar_prefetch=0,
            grid=(B, N // tq, N // tk),
            in_specs=[
                pl.BlockSpec((1, C, tq), lambda b, qi, ki: (b, 0, qi)),   # x (q / residual)
                pl.BlockSpec((1, tk, C8), lambda b, qi, ki: (b, ki, 0)),  # K tile
                pl.BlockSpec((1, C, tk), lambda b, qi, ki: (b, 0, ki)),   # V tile
                pl.BlockSpec((C8, C), lambda b, qi, ki: (0, 0)),          # wq (resident)
                pl.BlockSpec((C8, 1), lambda b, qi, ki: (0, 0)),          # bq
                pl.BlockSpec(memory_space=pltpu.MemorySpace.SMEM),        # gamma scalar
            ],
            out_specs=pl.BlockSpec((1, C, tq), lambda b, qi, ki: (b, 0, qi)),
            scratch_shapes=[
                pltpu.VMEM((C8, tq), f32),   # projected query tile
                pltpu.VMEM((1, tq), f32),    # running max
                pltpu.VMEM((1, tq), f32),    # running denominator
                pltpu.VMEM((C, tq), f32),    # output accumulator
            ],
        ),
        compiler_params=pltpu.CompilerParams(
            dimension_semantics=("parallel", "parallel", "arbitrary"),
            vmem_limit_bytes=32 * 1024 * 1024),
    )(x_bcn, k_all, v_all, wq_f32, bq2, gamma2)

    return out_bcn.reshape(B, C, H, W)


def pam_reference(x_nchw, wq, wk, wv, bq, bk, bv, gamma):
    """Pure-JAX f32 reference mirroring the PyTorch forward (verification)."""
    B, C, H, W = x_nchw.shape
    N = H * W
    x = x_nchw.reshape(B, C, N).astype(jnp.float32)
    q = jnp.einsum("oc,bcn->bon", wq, x) + bq[None, :, None]
    k = jnp.einsum("oc,bcn->bon", wk, x) + bk[None, :, None]
    v = jnp.einsum("oc,bcn->bon", wv, x) + bv[None, :, None]
    energy = jnp.einsum("bci,bcj->bij", q, k)        # [b, query i, key j]
    attn = jax.nn.softmax(energy, axis=-1)
    out = jnp.einsum("bcj,bij->bci", v, attn)
    out = gamma * out + x
    return out.reshape(B, C, H, W).astype(x_nchw.dtype)


if __name__ == "__main__":
    # Small shapes consistent with the module (in_dim must be >= 8).
    B, C, H, W = 2, 32, 16, 16          # N = 256 -> multi-tile with 128 tiles
    C8 = C // 8

    key = jax.random.PRNGKey(0)
    kx, kq, kk, kv_, kbq, kbk, kbv = jax.random.split(key, 7)

    x = jax.random.normal(kx, (B, C, H, W), dtype=jnp.float32)

    # Conv2d 1x1 weights in (out_c, in_c) layout; kaiming_normal_ std sqrt(2/C).
    std = (2.0 / C) ** 0.5
    wq = std * jax.random.normal(kq, (C8, C), dtype=jnp.float32)
    wk = std * jax.random.normal(kk, (C8, C), dtype=jnp.float32)
    wv = std * jax.random.normal(kv_, (C, C), dtype=jnp.float32)

    # Conv2d default bias init: U(-1/sqrt(fan_in), 1/sqrt(fan_in)).
    bnd = 1.0 / (C ** 0.5)
    bq = jax.random.uniform(kbq, (C8,), jnp.float32, -bnd, bnd)
    bk = jax.random.uniform(kbk, (C8,), jnp.float32, -bnd, bnd)
    bv = jax.random.uniform(kbv, (C,), jnp.float32, -bnd, bnd)

    # gamma = 0 (module init): out == x.  Small tiles exercise the online
    # softmax over a (2, 2, 2) grid.
    out0 = jax.block_until_ready(
        pam_forward(x, wq, wk, wv, bq, bk, bv, jnp.float32(0.0), tq=128, tk=128, tn=128))
    ref0 = pam_reference(x, wq, wk, wv, bq, bk, bv, jnp.float32(0.0))
    assert out0.shape == (B, C, H, W)
    assert jnp.allclose(out0, ref0, atol=1e-5, rtol=1e-5)

    # Nonzero gamma exercises the attention path (bf16 attn@V -> looser tol).
    g = jnp.float32(0.7)
    out1 = jax.block_until_ready(
        pam_forward(x, wq, wk, wv, bq, bk, bv, g, tq=128, tk=128, tn=128))
    ref1 = pam_reference(x, wq, wk, wv, bq, bk, bv, g)
    assert jnp.allclose(out1, ref1, atol=2e-2, rtol=2e-2)

    # Default (larger) tiles: single-tile fast path.
    out2 = jax.block_until_ready(pam_forward(x, wq, wk, wv, bq, bk, bv, g))
    assert jnp.allclose(out2, ref1, atol=2e-2, rtol=2e-2)

    print("KERNEL_OK")
</pallas_src>

<mosaic_0001>
module attributes {stable_mosaic.version = 11 : i64} {
  func.func @_kv_proj_kernel(%arg0: i32, %arg1: i32, %arg2: memref<1x32x128xf32, #tpu.memory_space<vmem>>, %arg3: memref<4x32xf32, #tpu.memory_space<vmem>>, %arg4: memref<32x32xbf16, #tpu.memory_space<vmem>>, %arg5: memref<4x1xf32, #tpu.memory_space<vmem>>, %arg6: memref<32x1xf32, #tpu.memory_space<vmem>>, %arg7: memref<1x128x4xf32, #tpu.memory_space<vmem>>, %arg8: memref<1x32x128xbf16, #tpu.memory_space<vmem>>) attributes {dimension_semantics = [#tpu.dimension_semantics<parallel>, #tpu.dimension_semantics<parallel>], iteration_bounds = array<i64: 2, 2>, scalar_prefetch = 0 : i64, scratch_operands = 0 : i64, tpu.core_type = #tpu.core_type<tc>, window_params = [{transform_indices = @transform_0, window_bounds = array<i64: 1, 32, 128>}, {pipeline_mode = #tpu.pipeline_mode<synchronous>, transform_indices = @transform_1, window_bounds = array<i64: 4, 32>}, {pipeline_mode = #tpu.pipeline_mode<synchronous>, transform_indices = @transform_2, window_bounds = array<i64: 32, 32>}, {pipeline_mode = #tpu.pipeline_mode<synchronous>, transform_indices = @transform_3, window_bounds = array<i64: 4, 1>}, {pipeline_mode = #tpu.pipeline_mode<synchronous>, transform_indices = @transform_4, window_bounds = array<i64: 32, 1>}, {transform_indices = @transform_5, window_bounds = array<i64: 1, 128, 4>}, {transform_indices = @transform_6, window_bounds = array<i64: 1, 32, 128>}]} {
    %c0 = arith.constant 0 : index
    %c0_0 = arith.constant 0 : index
    %c0_1 = arith.constant 0 : index
    %0 = vector.load %arg2[%c0, %c0_0, %c0_1] : memref<1x32x128xf32, #tpu.memory_space<vmem>>, vector<1x32x128xf32>
    %1 = vector.shape_cast %0 : vector<1x32x128xf32> to vector<32x128xf32>
    %c0_2 = arith.constant 0 : index
    %c0_3 = arith.constant 0 : index
    %2 = vector.load %arg3[%c0_2, %c0_3] : memref<4x32xf32, #tpu.memory_space<vmem>>, vector<4x32xf32>
    %cst = arith.constant dense<0.000000e+00> : vector<4x128xf32>
    %3 = tpu.matmul %2, %1, %cst {dimension_numbers = #tpu.dot_dimension_numbers<[1], [0], [0], [1], [0, 0, 1, 1], [], []>} : vector<4x32xf32>, vector<32x128xf32>, vector<4x128xf32> -> vector<4x128xf32>
    %c0_4 = arith.constant 0 : index
    %c0_5 = arith.constant 0 : index
    %4 = vector.load %arg5[%c0_4, %c0_5] : memref<4x1xf32, #tpu.memory_space<vmem>>, vector<4x1xf32>
    %5 = vector.broadcast %4 : vector<4x1xf32> to vector<4x128xf32>
    %6 = arith.addf %3, %5 : vector<4x128xf32>
    %7 = tpu.transpose %6, [1, 0] : vector<4x128xf32> -> vector<128x4xf32>
    %c0_6 = arith.constant 0 : index
    %c0_7 = arith.constant 0 : index
    %c0_8 = arith.constant 0 : index
    %8 = vector.load %arg7[%c0_6, %c0_7, %c0_8] : memref<1x128x4xf32, #tpu.memory_space<vmem>>, vector<1x128x4xf32>
    %9 = vector.shape_cast %8 : vector<1x128x4xf32> to vector<128x4xf32>
    %10 = vector.shape_cast %7 : vector<128x4xf32> to vector<1x128x4xf32>
    tpu.vector_store %arg7[%c0_6, %c0_7, %c0_8], %10 {strides = array<i32>} : memref<1x128x4xf32, #tpu.memory_space<vmem>>, vector<1x128x4xf32>,
    %c0_9 = arith.constant 0 : index
    %c0_10 = arith.constant 0 : index
    %11 = vector.load %arg4[%c0_9, %c0_10] : memref<32x32xbf16, #tpu.memory_space<vmem>>, vector<32x32xbf16>
    %12 = arith.truncf %1 : vector<32x128xf32> to vector<32x128xbf16>
    %cst_11 = arith.constant dense<0.000000e+00> : vector<32x128xf32>
    %13 = tpu.matmul %11, %12, %cst_11 {dimension_numbers = #tpu.dot_dimension_numbers<[1], [0], [0], [1], [0, 0, 1, 1], [], []>} : vector<32x32xbf16>, vector<32x128xbf16>, vector<32x128xf32> -> vector<32x128xf32>
    %c0_12 = arith.constant 0 : index
    %c0_13 = arith.constant 0 : index
    %14 = vector.load %arg6[%c0_12, %c0_13] : memref<32x1xf32, #tpu.memory_space<vmem>>, vector<32x1xf32>
    %15 = vector.broadcast %14 : vector<32x1xf32> to vector<32x128xf32>
    %16 = arith.addf %13, %15 : vector<32x128xf32>
    %17 = arith.truncf %16 : vector<32x128xf32> to vector<32x128xbf16>
    %c0_14 = arith.constant 0 : index
    %c0_15 = arith.constant 0 : index
    %c0_16 = arith.constant 0 : index
    %18 = vector.load %arg8[%c0_14, %c0_15, %c0_16] : memref<1x32x128xbf16, #tpu.memory_space<vmem>>, vector<1x32x128xbf16>
    %19 = vector.shape_cast %18 : vector<1x32x128xbf16> to vector<32x128xbf16>
    %20 = vector.shape_cast %17 : vector<32x128xbf16> to vector<1x32x128xbf16>
    tpu.vector_store %arg8[%c0_14, %c0_15, %c0_16], %20 {strides = array<i32>} : memref<1x32x128xbf16, #tpu.memory_space<vmem>>, vector<1x32x128xbf16>,
    return
  }
  func.func @transform_0(%arg0: i32, %arg1: i32) -> (i32, i32, i32) {
    %c0_i32 = arith.constant 0 : i32
    %c0_i32_0 = arith.constant 0 : i32
    return %arg0, %c0_i32, %arg1 : i32, i32, i32
  }
  func.func @transform_1(%arg0: i32, %arg1: i32) -> (i32, i32) {
    %c0_i32 = arith.constant 0 : i32
    %c0_i32_0 = arith.constant 0 : i32
    %c0_i32_1 = arith.constant 0 : i32
    return %c0_i32, %c0_i32_0 : i32, i32
  }
  func.func @transform_2(%arg0: i32, %arg1: i32) -> (i32, i32) {
    %c0_i32 = arith.constant 0 : i32
    %c0_i32_0 = arith.constant 0 : i32
    %c0_i32_1 = arith.constant 0 : i32
    return %c0_i32, %c0_i32_0 : i32, i32
  }
  func.func @transform_3(%arg0: i32, %arg1: i32) -> (i32, i32) {
    %c0_i32 = arith.constant 0 : i32
    %c0_i32_0 = arith.constant 0 : i32
    %c0_i32_1 = arith.constant 0 : i32
    return %c0_i32, %c0_i32_0 : i32, i32
  }
  func.func @transform_4(%arg0: i32, %arg1: i32) -> (i32, i32) {
    %c0_i32 = arith.constant 0 : i32
    %c0_i32_0 = arith.constant 0 : i32
    %c0_i32_1 = arith.constant 0 : i32
    return %c0_i32, %c0_i32_0 : i32, i32
  }
  func.func @transform_5(%arg0: i32, %arg1: i32) -> (i32, i32, i32) {
    %c0_i32 = arith.constant 0 : i32
    %c0_i32_0 = arith.constant 0 : i32
    return %arg0, %arg1, %c0_i32 : i32, i32, i32
  }
  func.func @transform_6(%arg0: i32, %arg1: i32) -> (i32, i32, i32) {
    %c0_i32 = arith.constant 0 : i32
    %c0_i32_0 = arith.constant 0 : i32
    return %arg0, %c0_i32, %arg1 : i32, i32, i32
  }
}

</mosaic_0001>

<llo_original>
// kernel: tpu_custom_call.1
$region0: #{tpu_custom_call.1}
  #allocation0 [shape = 'u32[]', space=smem, size = 0x4, offset = 0x4, fixed_abs, tag = 'smem constant byte address 0x4 - core index']
  #allocation1 [shape = 'u32[144,128]{1,0:T(1,128)}', space=vmem, size = 0x12000, scoped, tag = 'internal scratch']
  %s0 = inlined_call_operand.hbm [shape: f32[2,32,256], index: 0, kind: input, shape index: {}]
  %s1 = inlined_call_operand.vmem [shape: f32[4,32], index: 1, kind: input, shape index: {}]
  %s2 = inlined_call_operand.vmem [shape: bf16[32,32], index: 2, kind: input, shape index: {}]
  %s3 = inlined_call_operand.vmem [shape: f32[4,1], index: 3, kind: input, shape index: {}]
  %s4 = inlined_call_operand.vmem [shape: f32[32,1], index: 4, kind: input, shape index: {}]
  %s5 = inlined_call_operand.vmem [shape: f32[2,256,4], index: 5, kind: output, shape index: {0}]
  %s6 = inlined_call_operand.hbm [shape: bf16[2,32,256], index: 6, kind: output, shape index: {1}]
  %7 = xla_tuple %s5, %s6
  %s8 = sld [smem:[#allocation0]]
  $region65: #{tpu_custom_call.1} parent=0
    _
  %s10 = ssub.s32 1, %s8
  %s11 = scalar_select 0, %s10, %s8
  $region1: #{tpu_custom_call.1} parent=0
    #allocation2 [shape = 'u8[32768]{0}', space=vmem, size = 0x8000, scoped, tag = 'input window, operand 0']
    #allocation3 [shape = 's32[2]{0}', space=sflag, size = 0x8, scoped, tag = 'scoped memory for tpu_custom_call.1']
    #allocation4 [shape = 's32[2]{0}', space=sflag, size = 0x8, scoped, tag = 'scoped memory for tpu_custom_call.1']
    #allocation5 [shape = 'u8[16384]{0}', space=vmem, size = 0x4000, scoped, tag = 'output window, operand 1']
    %12 = vsyncpa [#allocation3], 0
    %s13 = scalar_lea.sflag [#allocation3], 1
    %14 = vsyncpa %s13, 0
    %15 = vsyncpa [#allocation4], 0
    %s16 = scalar_lea.sflag [#allocation4], 1
    %17 = vsyncpa %s16, 0
    loop: start=0, step=1, limit=6
    $region2: #{tpu_custom_call.1} parent=1 // loop_pre_header
      _
    $region3: #{tpu_custom_call.1} parent=1 // loop_header
      %s19 = sphi 0, %s23
      %p20 = scmp.ge.s32.totalorder %s19, 6
      %s26 = sphi 0, %s38
      %s27 = sphi 0, %s34
      %s28 = sphi 0, %s26
      %s29 = sphi 0, %s27
      %s30 = sphi 0, %s28
      %s31 = sphi 0, %s29
      %s43 = sphi 0, %s45
      %s46 = sphi 0, %s43
      %s47 = sphi 0, %s46
      %s63 = sphi 0, %s47
      %s67 = sphi 0, %s67
      %s69 = sphi 0, %s67
      %s70 = sphi 0, %s69
      %s84 = sphi 0, %s70
      %s88 = sphi 0, %s88
      %s90 = sphi 0, %s88
      %s91 = sphi 0, %s90
      %s105 = sphi 0, %s91
      %s109 = sphi 0, %s109
      %s111 = sphi 0, %s109
      %s112 = sphi 0, %s111
      %s126 = sphi 0, %s112
      %s130 = sphi 0, %s130
      %s132 = sphi 0, %s130
      %s133 = sphi 0, %s132
      %s147 = sphi 0, %s133
      %s155 = sphi 0, %s157
      %s158 = sphi 0, %s155
      %s159 = sphi 0, %s158
      %s175 = sphi 0, %s159
      %s183 = sphi 0, %s185
      %s186 = sphi 0, %s183
      %s187 = sphi 0, %s186
      %s203 = sphi 0, %s187
    $region4: #{tpu_custom_call.1} parent=1 // loop_header_branch
      %22 = sbr.rel (%p20) target = $region8
    $region5: #{tpu_custom_call.1} parent=1 // loop_body
      %s24 = ssub.s32 %s19, 1
      %s25 = ssub.s32 %s19, 2
      %s32 = sadd.s32 1, %s27
      %p33 = scmp.ge.s32.totalorder %s32, 2
      %s34 = scalar_select %p33, 0, %s32
      %s35 = sadd.s32 1, %s26
      %s36 = scalar_select %p33, %s35, %s26
      %p37 = scmp.ge.s32.totalorder %s36, 2
      %s38 = scalar_select %p37, 0, %s36
      %s39 = ssub.s32 %s26, %s38
      %s40 = ssub.s32 %s27, %s34
      %s41 = sor.u32 %s39, %s40
      %p42 = scmp.eq.s32.totalorder %s41, 0
      %s44 = sadd.s32 %s43, 1
      %s45 = scalar_select %p42, %s43, %s44
      %p48 = pneg %p42
      %p49 = scmp.eq.s32.totalorder %s19, 3
      %p50 = por %p48, %p49
      %p51 = scmp.ne.s32.totalorder %s43, %s46
      %p52 = scmp.eq.s32.totalorder %s19, 0
      %p53 = por %p51, %p52
      %p54 = scmp.ne.s32.totalorder %s43, %s46
      %p55 = scmp.eq.s32.totalorder %s24, 3
      %p56 = por %p54, %p55
      %p57 = scmp.ne.s32.totalorder %s46, %s47
      %p58 = scmp.eq.s32.totalorder %s24, 0
      %p59 = por %p57, %p58
      %p60 = scmp.ne.s32.totalorder %s46, %s47
      %p61 = scmp.eq.s32.totalorder %s25, 3
      %p62 = por %p60, %p61
      %p64 = scmp.ne.s32.totalorder %s47, %s63
      %p65 = scmp.eq.s32.totalorder %s25, 0
      %p66 = por %p64, %p65
      %s68 = sadd.s32 %s67, 1
      %p71 = scmp.eq.s32.totalorder %s19, 3
      %p72 = scmp.ne.s32.totalorder %s67, %s69
      %p73 = scmp.eq.s32.totalorder %s19, 0
      %p74 = por %p72, %p73
      %p75 = scmp.ne.s32.totalorder %s67, %s69
      %p76 = scmp.eq.s32.totalorder %s24, 3
      %p77 = por %p75, %p76
      %p78 = scmp.ne.s32.totalorder %s69, %s70
      %p79 = scmp.eq.s32.totalorder %s24, 0
      %p80 = por %p78, %p79
      %p81 = scmp.ne.s32.totalorder %s69, %s70
      %p82 = scmp.eq.s32.totalorder %s25, 3
      %p83 = por %p81, %p82
      %p85 = scmp.ne.s32.totalorder %s70, %s84
      %p86 = scmp.eq.s32.totalorder %s25, 0
      %p87 = por %p85, %p86
      %s89 = sadd.s32 %s88, 1
      %p92 = scmp.eq.s32.totalorder %s19, 3
      %p93 = scmp.ne.s32.totalorder %s88, %s90
      %p94 = scmp.eq.s32.totalorder %s19, 0
      %p95 = por %p93, %p94
      %p96 = scmp.ne.s32.totalorder %s88, %s90
      %p97 = scmp.eq.s32.totalorder %s24, 3
      %p98 = por %p96, %p97
      %p99 = scmp.ne.s32.totalorder %s90, %s91
      %p100 = scmp.eq.s32.totalorder %s24, 0
      %p101 = por %p99, %p100
      %p102 = scmp.ne.s32.totalorder %s90, %s91
      %p103 = scmp.eq.s32.totalorder %s25, 3
      %p104 = por %p102, %p103
      %p106 = scmp.ne.s32.totalorder %s91, %s105
      %p107 = scmp.eq.s32.totalorder %s25, 0
      %p108 = por %p106, %p107
      %s110 = sadd.s32 %s109, 1
      %p113 = scmp.eq.s32.totalorder %s19, 3
      %p114 = scmp.ne.s32.totalorder %s109, %s111
      %p115 = scmp.eq.s32.totalorder %s19, 0
      %p116 = por %p114, %p115
      %p117 = scmp.ne.s32.totalorder %s109, %s111
      %p118 = scmp.eq.s32.totalorder %s24, 3
      %p119 = por %p117, %p118
      %p120 = scmp.ne.s32.totalorder %s111, %s112
      %p121 = scmp.eq.s32.totalorder %s24, 0
      %p122 = por %p120, %p121
      %p123 = scmp.ne.s32.totalorder %s111, %s112
      %p124 = scmp.eq.s32.totalorder %s25, 3
      %p125 = por %p123, %p124
      %p127 = scmp.ne.s32.totalorder %s112, %s126
      %p128 = scmp.eq.s32.totalorder %s25, 0
      %p129 = por %p127, %p128
      %s131 = sadd.s32 %s130, 1
      %p134 = scmp.eq.s32.totalorder %s19, 3
      %p135 = scmp.ne.s32.totalorder %s130, %s132
      %p136 = scmp.eq.s32.totalorder %s19, 0
      %p137 = por %p135, %p136
      %p138 = scmp.ne.s32.totalorder %s130, %s132
      %p139 = scmp.eq.s32.totalorder %s24, 3
      %p140 = por %p138, %p139
      %p141 = scmp.ne.s32.totalorder %s132, %s133
      %p142 = scmp.eq.s32.totalorder %s24, 0
      %p143 = por %p141, %p142
      %p144 = scmp.ne.s32.totalorder %s132, %s133
      %p145 = scmp.eq.s32.totalorder %s25, 3
      %p146 = por %p144, %p145
      %p148 = scmp.ne.s32.totalorder %s133, %s147
      %p149 = scmp.eq.s32.totalorder %s25, 0
      %p150 = por %p148, %p149
      %s151 = ssub.s32 %s26, %s38
      %s152 = ssub.s32 %s27, %s34
      %s153 = sor.u32 %s151, %s152
      %p154 = scmp.eq.s32.totalorder %s153, 0
      %s156 = sadd.s32 %s155, 1
      %s157 = scalar_select %p154, %s155, %s156
      %p160 = pneg %p154
      %p161 = scmp.eq.s32.totalorder %s19, 3
      %p162 = por %p160, %p161
      %p163 = scmp.ne.s32.totalorder %s155, %s158
      %p164 = scmp.eq.s32.totalorder %s19, 0
      %p165 = por %p163, %p164
      %p166 = scmp.ne.s32.totalorder %s155, %s158
      %p167 = scmp.eq.s32.totalorder %s24, 3
      %p168 = por %p166, %p167
      %p169 = scmp.ne.s32.totalorder %s158, %s159
      %p170 = scmp.eq.s32.totalorder %s24, 0
      %p171 = por %p169, %p170
      %p172 = scmp.ne.s32.totalorder %s158, %s159
      %p173 = scmp.eq.s32.totalorder %s25, 3
      %p174 = por %p172, %p173
      %p176 = scmp.ne.s32.totalorder %s159, %s175
      %p177 = scmp.eq.s32.totalorder %s25, 0
      %p178 = por %p176, %p177
      %s179 = ssub.s32 %s26, %s38
      %s180 = ssub.s32 %s27, %s34
      %s181 = sor.u32 %s179, %s180
      %p182 = scmp.eq.s32.totalorder %s181, 0
      %s184 = sadd.s32 %s183, 1
      %s185 = scalar_select %p182, %s183, %s184
      %p188 = pneg %p182
      %p189 = scmp.eq.s32.totalorder %s19, 3
      %p190 = por %p188, %p189
      %p191 = scmp.ne.s32.totalorder %s183, %s186
      %p192 = scmp.eq.s32.totalorder %s19, 0
      %p193 = por %p191, %p192
      %p194 = scmp.ne.s32.totalorder %s183, %s186
      %p195 = scmp.eq.s32.totalorder %s24, 3
      %p196 = por %p194, %p195
      %p197 = scmp.ne.s32.totalorder %s186, %s187
      %p198 = scmp.eq.s32.totalorder %s24, 0
      %p199 = por %p197, %p198
      %p200 = scmp.ne.s32.totalorder %s186, %s187
      %p201 = scmp.eq.s32.totalorder %s25, 3
      %p202 = por %p200, %p201
      %p204 = scmp.ne.s32.totalorder %s187, %s203
      %p205 = scmp.eq.s32.totalorder %s25, 0
      %p206 = por %p204, %p205
      %p207 = scmp.le.s32.totalorder 1, %s19
      %p208 = scmp.lt.s32.totalorder %s19, 5
      %p209 = pnand %p207, %p208
      %p210 = pneg %p209
      // Predicated region
      $region9: #{tpu_custom_call.1} parent=5 // pred_check
        _
      $region10: #{tpu_custom_call.1} parent=5 // pred_check_branch
        %212 = sbr.rel (%p209) target = $region12
      $region11: #{tpu_custom_call.1} parent=5 // pred_region
        %s213 = ssub.s32 %s19, 1
        // Predicated region
        $region13: #{tpu_custom_call.1} parent=11 // pred_check
          %p214 = pneg %p80
        $region14: #{tpu_custom_call.1} parent=11 // pred_check_branch
          %216 = sbr.rel (%p214) target = $region16
        $region15: #{tpu_custom_call.1} parent=11 // pred_region
          _
        $region16: #{tpu_custom_call.1} parent=11 // pred_fallthru
          _
        // Predicated region
        $region17: #{tpu_custom_call.1} parent=11 // pred_check
          %p217 = pneg %p101
        $region18: #{tpu_custom_call.1} parent=11 // pred_check_branch
          %219 = sbr.rel (%p217) target = $region20
        $region19: #{tpu_custom_call.1} parent=11 // pred_region
          _
        $region20: #{tpu_custom_call.1} parent=11 // pred_fallthru
          _
        // Predicated region
        $region21: #{tpu_custom_call.1} parent=11 // pred_check
          %p220 = pneg %p122
        $region22: #{tpu_custom_call.1} parent=11 // pred_check_branch
          %222 = sbr.rel (%p220) target = $region24
        $region23: #{tpu_custom_call.1} parent=11 // pred_region
          _
        $region24: #{tpu_custom_call.1} parent=11 // pred_fallthru
          _
        // Predicated region
        $region25: #{tpu_custom_call.1} parent=11 // pred_check
          %p223 = pneg %p143
        $region26: #{tpu_custom_call.1} parent=11 // pred_check_branch
          %225 = sbr.rel (%p223) target = $region28
        $region27: #{tpu_custom_call.1} parent=11 // pred_region
          _
        $region28: #{tpu_custom_call.1} parent=11 // pred_fallthru
          _
      $region12: #{tpu_custom_call.1} parent=5 // pred_fallthru
        _
      %p226 = scmp.lt.s32.totalorder %s19, 4
      // Predicated region
      $region29: #{tpu_custom_call.1} parent=5 // pred_check
        %p227 = pneg %p226
      $region30: #{tpu_custom_call.1} parent=5 // pred_check_branch
        %229 = sbr.rel (%p227) target = $region32
      $region31: #{tpu_custom_call.1} parent=5 // pred_region
        // Predicated region
        $region33: #{tpu_custom_call.1} parent=31 // pred_check
          %p230 = pneg %p53
        $region34: #{tpu_custom_call.1} parent=31 // pred_check_branch
          %232 = sbr.rel (%p230) target = $region36
        $region35: #{tpu_custom_call.1} parent=31 // pred_region
          %s233 = sand.u32 %s43, 1
          %s234 = scalar_lea.sflag [#allocation3], %s233
          %s235 = sand.u32 %s43, 1
          %s236 = smul.addr %s235, 32
          %s237 = scalar_lea.vmem [#allocation2], %s236
          %s239 = ssub.s32 512, 512
          %240 = vsyncadd %s234, %s239
          %s241 = smul.addr %s26, 8
          %s242 = sadd.s32 %s27, %s241
          %s243 = smul.addr %s242, 128
          %s244 = scalar_lea.hbm %s0, %s243
          %s245 = sshll.u32 %s237, 4
          %s246 = int_to_ptr.vmem [resolvable:$true] %s245
          %251 = dma.hbm_to_vmem [thread:$0]  %s244, 512, %s246, %s234, 256, 128, 8
        $region36: #{tpu_custom_call.1} parent=31 // pred_fallthru
          _
      $region32: #{tpu_custom_call.1} parent=5 // pred_fallthru
        _
      %p252 = scmp.le.s32.totalorder 1, %s19
      %p253 = scmp.lt.s32.totalorder %s19, 5
      %p254 = pnand %p252, %p253
      %p255 = pneg %p254
      // Predicated region
      $region37: #{tpu_custom_call.1} parent=5 // pred_check
        _
      $region38: #{tpu_custom_call.1} parent=5 // pred_check_branch
        %257 = sbr.rel (%p254) target = $region40
      $region39: #{tpu_custom_call.1} parent=5 // pred_region
        %s258 = ssub.s32 %s19, 1
        %s259 = sand.u32 %s46, 1
        %s260 = scalar_lea.sflag [#allocation3], %s259
        %s261 = sand.u32 %s46, 1
        %s262 = smul.addr %s261, 32
        %s263 = scalar_lea.vmem [#allocation2], %s262
        // Predicated region
        $region41: #{tpu_custom_call.1} parent=39 // pred_check
          %p264 = pneg %p59
        $region42: #{tpu_custom_call.1} parent=39 // pred_check_branch
          %266 = sbr.rel (%p264) target = $region44
        $region43: #{tpu_custom_call.1} parent=39 // pred_region
          %267 = dma.done %s260, 512
        $region44: #{tpu_custom_call.1} parent=39 // pred_fallthru
          _
        %s268 = sand.u32 %s46, 1
        %s269 = scalar_lea.sflag [#allocation3], %s268
        %s270 = sand.u32 %s46, 1
        %s271 = smul.addr %s270, 32
        %s272 = scalar_lea.vmem [#allocation2], %s271
        %p273 = pneg %p59
        %p274 = pneg %p56
        %p275 = pneg %p80
        %p276 = pneg %p77
        %p277 = pneg %p101
        %p278 = pneg %p98
        %p279 = pneg %p122
        %p280 = pneg %p119
        %p281 = pneg %p143
        %p282 = pneg %p140
        %p283 = pneg %p171
        %p284 = pneg %p168
        %s285 = smul.u32 16, %s29
        %p286 = scmp.lt.s32.totalorder %s28, 1
        %s287 = scalar_select %p286, %s28, 1
        %p288 = scmp.lt.s32.totalorder %s285, 31
        %s289 = scalar_select %p288, %s285, 31
        %s290 = smul.addr %s287, 32
        %s291 = sadd.s32 %s289, %s290
        %s292 = smul.addr %s291, 8
        %s293 = scalar_lea.vmem %s5, %s292
        %p294 = pneg %p199
        %p295 = pneg %p196
        %s296 = sand.u32 %s186, 1
        %s297 = scalar_lea.sflag [#allocation4], %s296
        %s298 = sand.u32 %s186, 1
        %s299 = smul.addr %s298, 16
        %s300 = scalar_lea.vmem [#allocation5], %s299
        %s301 = smul.u32 16, %s29
        %p302 = scmp.lt.s32.totalorder %s28, 1
        %s303 = scalar_select %p302, %s28, 1
        %p304 = scmp.lt.s32.totalorder %s301, 31
        %s305 = scalar_select %p304, %s301, 31
        %s306 = smul.addr %s303, 32
        %s307 = sadd.s32 %s305, %s306
        %s308 = smul.addr %s307, 8
        %s309 = scalar_lea.vmem %s5, %s308
        %s310 = smul.u32 16, %s29
        %v312 = vld [vmem:[%s263] sm:$0xff]
        %v313 = vld [vmem:[%s263 + $0x8] sm:$0xff]
        %v314 = vld [vmem:[%s263 + $0x10] sm:$0xff]
        %v315 = vld [vmem:[%s263 + $0x18] sm:$0xff]
        %v316 = vld [vmem:[%s1] sm:$0xf]
        %v317 = vld [vmem:[%s3] sm:$0xf]
        %319 = vset.pattern.permute.xlu0 0
        %320 = vperm.xlu0 %319, %v317
        %v321 = vpop.permute.xlu0 %320
        %vm323 = vcmask 261120
        %v325 = vsel %vm323, %v316, 0
        %327 = vmatprep.subr.mxu0 0.0
        %328 = vmatpush1.msra.mxu0 %v312
        %329 = vmatprep.subr.mxu0 0.0
        %330 = vmatpush1.msra.mxu0 %v313
        %331 = vmatprep.subr.mxu0 0.0
        %332 = vmatpush1.msra.mxu0 %v314
        %333 = vmatprep.subr.mxu0 0.0
        %334 = vmatpush1.msra.mxu0 %v315
        %335 = vmatprep.subr.mxu0 0.0
        %336 = vmatpush1.msra.mxu0 0.0
        %337 = vmatprep.subr.mxu0 0.0
        %338 = vmatpush1.msra.mxu0 0.0
        %339 = vmatprep.subr.mxu0 0.0
        %340 = vmatpush1.msra.mxu0 0.0
        %341 = vmatprep.subr.mxu0 0.0
        %342 = vmatpush1.msra.mxu0 0.0
        %343 = vmatprep.subr.mxu0 0.0
        %344 = vmatpush1.msra.mxu0 0.0
        %345 = vmatprep.subr.mxu0 0.0
        %346 = vmatpush1.msra.mxu0 0.0
        %347 = vmatprep.subr.mxu0 0.0
        %348 = vmatpush1.msra.mxu0 0.0
        %349 = vmatprep.subr.mxu0 0.0
        %350 = vmatpush1.msra.mxu0 0.0
        %351 = vmatprep.subr.mxu0 0.0
        %352 = vmatpush1.msra.mxu0 0.0
        %353 = vmatprep.subr.mxu0 0.0
        %354 = vmatpush1.msra.mxu0 0.0
        %355 = vmatprep.subr.mxu0 0.0
        %356 = vmatpush1.msra.mxu0 0.0
        %357 = vmatprep.subr.mxu0 0.0
        %358 = vmatpush1.msra.mxu0 0.0
        %359 = vmatprep.subr.mxu0 0.0
        %360 = vmatpush1.msra.mxu0 0.0
        %361 = vmatprep.subr.mxu0 0.0
        %362 = vmatpush1.msra.mxu0 0.0
        %363 = vmatprep.subr.mxu0 0.0
        %364 = vmatpush1.msra.mxu0 0.0
        %365 = vmatprep.subr.mxu0 0.0
        %366 = vmatpush1.msra.mxu0 0.0
        %367 = vmatprep.subr.mxu0 0.0
        %368 = vmatpush1.msra.mxu0 0.0
        %369 = vmatprep.subr.mxu0 0.0
        %370 = vmatpush1.msra.mxu0 0.0
        %371 = vmatprep.subr.mxu0 0.0
        %372 = vmatpush1.msra.mxu0 0.0
        %373 = vmatprep.subr.mxu0 0.0
        %374 = vmatpush1.msra.mxu0 0.0
        %375 = vmatprep.subr.mxu0 0.0
        %376 = vmatpush1.msra.mxu0 0.0
        %377 = vmatprep.subr.mxu0 0.0
        %378 = vmatpush1.msra.mxu0 0.0
        %379 = vmatprep.subr.mxu0 0.0
        %380 = vmatpush1.msra.mxu0 0.0
        %381 = vmatprep.subr.mxu0 0.0
        %382 = vmatpush1.msra.mxu0 0.0
        %383 = vmatprep.subr.mxu0 0.0
        %384 = vmatpush1.msra.mxu0 0.0
        %385 = vmatprep.subr.mxu0 0.0
        %386 = vmatpush1.msra.mxu0 0.0
        %387 = vmatprep.subr.mxu0 0.0
        %388 = vmatpush1.msra.mxu0 0.0
        %389 = vmatprep.subr.mxu0 0.0
        %390 = vmatpush1.msra.mxu0 0.0
        %391 = vmatprep.mubr.f32.mxu0 0.0
        %392 = vmatmul.mubr.f32.gmra.mrb[0].mxu0 %v325
        %v393 = vpop.f32.mrb[0].mxu0
        %v394 = vadd.f32 %v321, %v393
        %v395 = vpop.f32.mrb[0].mxu0
        %396 = vdwg.mxu0
        %397 = vxpose.xlu0.b32.start [1/16] %v394, 128
        %398 = vxpose.xlu0.b32.cont [2/16] 0.0, 128
        %399 = vxpose.xlu0.b32.cont [3/16] 0.0, 128
        %400 = vxpose.xlu0.b32.cont [4/16] 0.0, 128
        %401 = vxpose.xlu0.b32.cont [5/16] 0.0, 128
        %402 = vxpose.xlu0.b32.cont [6/16] 0.0, 128
        %403 = vxpose.xlu0.b32.cont [7/16] 0.0, 128
        %404 = vxpose.xlu0.b32.cont [8/16] 0.0, 128
        %405 = vxpose.xlu0.b32.cont [9/16] 0.0, 128
        %406 = vxpose.xlu0.b32.cont [10/16] 0.0, 128
        %407 = vxpose.xlu0.b32.cont [11/16] 0.0, 128
        %408 = vxpose.xlu0.b32.cont [12/16] 0.0, 128
        %409 = vxpose.xlu0.b32.cont [13/16] 0.0, 128
        %410 = vxpose.xlu0.b32.cont [14/16] 0.0, 128
        %411 = vxpose.xlu0.b32.cont [15/16] 0.0, 128
        %412 = vxpose.xlu0.b32.end [16/16] 0.0, 128
        %v413 = vpop.trf.xlu0
        %v414 = vpop.trf.xlu0
        %v415 = vpop.trf.xlu0
        %v416 = vpop.trf.xlu0
        %v417 = vpop.trf.xlu0
        %v418 = vpop.trf.xlu0
        %v419 = vpop.trf.xlu0
        %v420 = vpop.trf.xlu0
        %v421 = vpop.trf.xlu0
        %v422 = vpop.trf.xlu0
        %v423 = vpop.trf.xlu0
        %v424 = vpop.trf.xlu0
        %v425 = vpop.trf.xlu0
        %v426 = vpop.trf.xlu0
        %v427 = vpop.trf.xlu0
        %v428 = vpop.trf.xlu0
        %vm429 = vcmask 31744
        %430 = vst.msk [vmem:[%s309] sm:$0xff] %vm429, %v413
        %431 = vst.msk [vmem:[%s309 + $0x8] sm:$0xff] %vm429, %v414
        %432 = vst.msk [vmem:[%s309 + $0x10] sm:$0xff] %vm429, %v415
        %433 = vst.msk [vmem:[%s309 + $0x18] sm:$0xff] %vm429, %v416
        %434 = vst.msk [vmem:[%s309 + $0x20] sm:$0xff] %vm429, %v417
        %435 = vst.msk [vmem:[%s309 + $0x28] sm:$0xff] %vm429, %v418
        %436 = vst.msk [vmem:[%s309 + $0x30] sm:$0xff] %vm429, %v419
        %437 = vst.msk [vmem:[%s309 + $0x38] sm:$0xff] %vm429, %v420
        %438 = vst.msk [vmem:[%s309 + $0x40] sm:$0xff] %vm429, %v421
        %439 = vst.msk [vmem:[%s309 + $0x48] sm:$0xff] %vm429, %v422
        %440 = vst.msk [vmem:[%s309 + $0x50] sm:$0xff] %vm429, %v423
        %441 = vst.msk [vmem:[%s309 + $0x58] sm:$0xff] %vm429, %v424
        %442 = vst.msk [vmem:[%s309 + $0x60] sm:$0xff] %vm429, %v425
        %443 = vst.msk [vmem:[%s309 + $0x68] sm:$0xff] %vm429, %v426
        %444 = vst.msk [vmem:[%s309 + $0x70] sm:$0xff] %vm429, %v427
        %445 = vst.msk [vmem:[%s309 + $0x78] sm:$0xff] %vm429, %v428
        %v446 = vld [vmem:[%s2] sm:$0xf]
        %v447 = vld [vmem:[%s2 + $0x4] sm:$0xf]
        %v448 = vld [vmem:[%s2 + $0x8] sm:$0xf]
        %v449 = vld [vmem:[%s2 + $0xc] sm:$0xf]
        %v450 = vpack.c.bf16 %v313, %v312
        %v451 = vpack.c.bf16 %v315, %v314
        %v452 = vld [vmem:[%s4] sm:$0xff]
        %v453 = vld [vmem:[%s4 + $0x8] sm:$0xff]
        %v454 = vld [vmem:[%s4 + $0x10] sm:$0xff]
        %v455 = vld [vmem:[%s4 + $0x18] sm:$0xff]
        %457 = vset.pattern.permute.xlu0 0
        %458 = vperm.xlu0 %457, %v452
        %v459 = vpop.permute.xlu0 %458
        %462 = vset.pattern.permute.xlu0 0
        %463 = vperm.xlu0 %462, %v453
        %v464 = vpop.permute.xlu0 %463
        %467 = vset.pattern.permute.xlu0 0
        %468 = vperm.xlu0 %467, %v454
        %v469 = vpop.permute.xlu0 %468
        %472 = vset.pattern.permute.xlu0 0
        %473 = vperm.xlu0 %472, %v455
        %v474 = vpop.permute.xlu0 %473
        %v480 = vunpack.c.l.b16 %v446
        %v481 = vunpack.c.l.b16 %v447
        %v482 = vunpack.c.l.b16 %v448
        %v483 = vunpack.c.l.b16 %v449
        %v484 = vpack.c.b16 %v481, %v480
        %v485 = vpack.c.b16 %v483, %v482
        %v487 = vsel %vm323, %v484, 0
        %v490 = vsel %vm323, %v485, 0
        %492 = vmatprep.subr.bf16.mxu0 0
        %493 = vmatpush1.bf16.msra.mxu0 %v450
        %494 = vmatprep.subr.bf16.mxu0 0
        %495 = vmatpush1.bf16.msra.mxu0 %v451
        %496 = vmatprep.subr.bf16.mxu0 0
        %497 = vmatpush1.bf16.msra.mxu0 0
        %498 = vmatprep.subr.bf16.mxu0 0
        %499 = vmatpush1.bf16.msra.mxu0 0
        %500 = vmatprep.subr.bf16.mxu0 0
        %501 = vmatpush1.bf16.msra.mxu0 0
        %502 = vmatprep.subr.bf16.mxu0 0
        %503 = vmatpush1.bf16.msra.mxu0 0
        %504 = vmatprep.subr.bf16.mxu0 0
        %505 = vmatpush1.bf16.msra.mxu0 0
        %506 = vmatprep.subr.bf16.mxu0 0
        %507 = vmatpush1.bf16.msra.mxu0 0
        %508 = vmatprep.subr.bf16.mxu0 0
        %509 = vmatpush1.bf16.msra.mxu0 0
        %510 = vmatprep.subr.bf16.mxu0 0
        %511 = vmatpush1.bf16.msra.mxu0 0
        %512 = vmatprep.subr.bf16.mxu0 0
        %513 = vmatpush1.bf16.msra.mxu0 0
        %514 = vmatprep.subr.bf16.mxu0 0
        %515 = vmatpush1.bf16.msra.mxu0 0
        %516 = vmatprep.subr.bf16.mxu0 0
        %517 = vmatpush1.bf16.msra.mxu0 0
        %518 = vmatprep.subr.bf16.mxu0 0
        %519 = vmatpush1.bf16.msra.mxu0 0
        %520 = vmatprep.subr.bf16.mxu0 0
        %521 = vmatpush1.bf16.msra.mxu0 0
        %522 = vmatprep.subr.bf16.mxu0 0
        %523 = vmatpush1.bf16.msra.mxu0 0
        %524 = vmatprep.mubr.bf16.mxu0 0
        %525 = vmatmul.mubr.bf16.gmra.mrb[0].mxu0 %v487
        %v526 = vpop.f32.mrb[0].mxu0
        %v527 = vadd.f32 %v459, %v526
        %v528 = vpop.f32.mrb[0].mxu0
        %v529 = vpop.f32.mrb[0].mxu0
        %v530 = vadd.f32 %v464, %v529
        %v531 = vpop.f32.mrb[0].mxu0
        %532 = vmatprep.mubr.bf16.mxu0 0
        %533 = vmatmul.mubr.bf16.gmra.mrb[0].mxu0 %v490
        %v534 = vpop.f32.mrb[0].mxu0
        %v535 = vadd.f32 %v469, %v534
        %v536 = vpop.f32.mrb[0].mxu0
        %v537 = vpop.f32.mrb[0].mxu0
        %v538 = vadd.f32 %v474, %v537
        %v539 = vpop.f32.mrb[0].mxu0
        %540 = vdwg.mxu0
        %v541 = vpack.c.bf16 %v530, %v527
        %v542 = vpack.c.bf16 %v538, %v535
        %v545 = vunpack.c.l.b16 %v541
        %v546 = vunpack.c.h.b16 %v541
        %v547 = vunpack.c.l.b16 %v542
        %v548 = vunpack.c.h.b16 %v542
        %v549 = vpack.c.b16 %v545, %v545
        %v550 = vpack.c.b16 %v546, %v546
        %v551 = vpack.c.b16 %v547, %v547
        %v552 = vpack.c.b16 %v548, %v548
        %557 = vst [vmem:[%s300] sm:$0xf] %v549
        %558 = vst [vmem:[%s300 + $0x4] sm:$0xf] %v550
        %559 = vst [vmem:[%s300 + $0x8] sm:$0xf] %v551
        %560 = vst [vmem:[%s300 + $0xc] sm:$0xf] %v552
        %s561 = smul.u32 16, %s29
        %p562 = scmp.lt.s32.totalorder %s28, 1
        %s563 = scalar_select %p562, %s28, 1
        %p564 = scmp.lt.s32.totalorder %s561, 31
        %s565 = scalar_select %p564, %s561, 31
        %s566 = smul.addr %s563, 32
        %s567 = sadd.s32 %s565, %s566
        %s568 = smul.addr %s567, 8
        %s569 = scalar_lea.vmem %s5, %s568
        %s570 = sand.u32 %s186, 1
        %s571 = scalar_lea.sflag [#allocation4], %s570
        %s572 = sand.u32 %s186, 1
        %s573 = smul.addr %s572, 16
        %s574 = scalar_lea.vmem [#allocation5], %s573
        // Predicated region
        $region45: #{tpu_custom_call.1} parent=39 // pred_check
          %p575 = pneg %p168
        $region46: #{tpu_custom_call.1} parent=39 // pred_check_branch
          %577 = sbr.rel (%p575) target = $region48
        $region47: #{tpu_custom_call.1} parent=39 // pred_region
          %s578 = smul.u32 16, %s29
        $region48: #{tpu_custom_call.1} parent=39 // pred_fallthru
          _
        // Predicated region
        $region49: #{tpu_custom_call.1} parent=39 // pred_check
          %p579 = pneg %p196
        $region50: #{tpu_custom_call.1} parent=39 // pred_check_branch
          %581 = sbr.rel (%p579) target = $region52
        $region51: #{tpu_custom_call.1} parent=39 // pred_region
          %s583 = ssub.s32 256, 256
          %584 = vsyncadd %s571, %s583
          %s585 = smul.addr %s28, 8
          %s586 = sadd.s32 %s29, %s585
          %s587 = smul.addr %s586, 64
          %s588 = scalar_lea.hbm %s6, %s587
          %s589 = sshll.u32 %s574, 4
          %s590 = int_to_ptr.vmem [resolvable:$true] %s589
          %595 = dma.vmem_to_hbm [thread:$0]  %s590, 256, %s588, %s571, 64, 128, 4
        $region52: #{tpu_custom_call.1} parent=39 // pred_fallthru
          _
      $region40: #{tpu_custom_call.1} parent=5 // pred_fallthru
        _
      %p596 = scmp.le.s32.totalorder 2, %s19
      // Predicated region
      $region53: #{tpu_custom_call.1} parent=5 // pred_check
        %p597 = pneg %p596
      $region54: #{tpu_custom_call.1} parent=5 // pred_check_branch
        %599 = sbr.rel (%p597) target = $region56
      $region55: #{tpu_custom_call.1} parent=5 // pred_region
        %s600 = ssub.s32 %s19, 2
        // Predicated region
        $region57: #{tpu_custom_call.1} parent=55 // pred_check
          %p601 = pneg %p174
        $region58: #{tpu_custom_call.1} parent=55 // pred_check_branch
          %603 = sbr.rel (%p601) target = $region60
        $region59: #{tpu_custom_call.1} parent=55 // pred_region
          %s604 = smul.u32 16, %s31
          %p605 = scmp.lt.s32.totalorder %s30, 1
          %s606 = scalar_select %p605, %s30, 1
          %p607 = scmp.lt.s32.totalorder %s604, 31
          %s608 = scalar_select %p607, %s604, 31
          %s609 = smul.addr %s606, 32
          %s610 = sadd.s32 %s608, %s609
          %s611 = smul.addr %s610, 8
          %s612 = scalar_lea.vmem %s5, %s611
        $region60: #{tpu_custom_call.1} parent=55 // pred_fallthru
          _
        // Predicated region
        $region61: #{tpu_custom_call.1} parent=55 // pred_check
          %p613 = pneg %p202
        $region62: #{tpu_custom_call.1} parent=55 // pred_check_branch
          %615 = sbr.rel (%p613) target = $region64
        $region63: #{tpu_custom_call.1} parent=55 // pred_region
          %s616 = sand.u32 %s187, 1
          %s617 = scalar_lea.sflag [#allocation4], %s616
          %s618 = sand.u32 %s187, 1
          %s619 = smul.addr %s618, 16
          %s620 = scalar_lea.vmem [#allocation5], %s619
          %621 = dma.done %s617, 256
        $region64: #{tpu_custom_call.1} parent=55 // pred_fallthru
          _
      $region56: #{tpu_custom_call.1} parent=5 // pred_fallthru
        _
    $region6: #{tpu_custom_call.1} parent=1 // loop_footer
      %s23 = sadd.s32 1, %s19
    $region7: #{tpu_custom_call.1} parent=1 // loop_footer_branch
      %18 = sbr.rel target = $region3
    $region8: #{tpu_custom_call.1} parent=1 // loop_exit
      _
    %622 = vsyncpa [#allocation3], 1
    %s623 = scalar_lea.sflag [#allocation3], 1
    %624 = vsyncpa %s623, 1
    %625 = vsyncpa [#allocation4], 1
    %s626 = scalar_lea.sflag [#allocation4], 1
    %627 = vsyncpa %s626, 1

</llo_original>
